<compile_context>
chip_gen: v6e
topology: v6e:2x2x1
jax: 0.10.0
libtpu: 0.0.40
codegen_flags: <defaults>
</compile_context>

<pallas_src>
import functools

import jax
import jax.numpy as jnp
from jax.experimental import pallas as pl
from jax.experimental.pallas import tpu as pltpu

BN_EPS = 1e-5

HYPER = [[1, 16, 1, 1], [6, 24, 2, 2], [6, 32, 3, 2], [6, 64, 4, 2],
         [6, 96, 3, 1], [6, 160, 3, 2], [6, 320, 1, 1]]


def _vmem_limit_bytes():
    # ~45% of physical VMEM: ~58 MB on v5e/v6e (128 MiB), ~29 MB on v7x (64 MiB).
    try:
        cap = pltpu.get_tpu_info().vmem_capacity_bytes
        return int(min(max(cap * 0.45, 24 * 1024 * 1024), 64 * 1024 * 1024))
    except Exception:
        return 48 * 1024 * 1024


VMEM_LIMIT = _vmem_limit_bytes()


# ---------------------------- Pallas kernels ----------------------------

def _mm_bias_kernel(x_ref, w_ref, b_ref, o_ref):
    # (TM, K) @ (K, N) on the MXU, f32 accumulate, + bias.
    y = jnp.dot(x_ref[...], w_ref[...], preferred_element_type=jnp.float32)
    o_ref[...] = (y + b_ref[...]).astype(o_ref.dtype)


def _tail_kernel(x_ref, w2_ref, b2_ref, wf_ref, bf_ref, o_ref):
    # Fused 1x1 conv2 (+bias) and fc (+bias) on the pooled features.
    t = jnp.dot(x_ref[...], w2_ref[...], preferred_element_type=jnp.float32)
    t = t + b2_ref[...]
    y = jnp.dot(t.astype(wf_ref.dtype), wf_ref[...],
                preferred_element_type=jnp.float32)
    o_ref[...] = (y + bf_ref[...]).astype(o_ref.dtype)


def _depthwise3x3(e, wd_ref, row_ok, col_ok, H, W):
    """3x3 depthwise conv (stride 1, pad 1) on flattened (M=H*W, Ce) f32 `e`.

    Column masks are folded into 3 dx-shifted copies, row masks into 3 per-dy
    partial sums -> 4 full-size selects instead of 9, center tap unmasked.
    """
    M = H * W

    def roll_by(v, shift):
        amt = (-shift) % M
        return v if amt == 0 else pltpu.roll(v, shift=amt, axis=0)

    f = {}
    for dx in (-1, 0, 1):
        t = roll_by(e, dx)
        if dx != 0:
            t = jnp.where(col_ok[dx], t, 0.0)
        f[dx] = t

    acc = None
    for dy in (-1, 0, 1):
        s = None
        for dx in (-1, 0, 1):
            k = (dy + 1) * 3 + (dx + 1)
            term = roll_by(f[dx], dy * W) * wd_ref[k:k + 1, :]
            s = term if s is None else s + term
        if dy != 0:
            s = jnp.where(row_ok[dy], s, 0.0)
        acc = s if acc is None else acc + s
    return acc


def _invres_apply(x, w1_ref, b1_ref, wd_ref, bd_ref, w3_ref, b3_ref,
                  row_ok, col_ok, H, W, use_add):
    """One inverted-residual block on an f32 (M, Cin) tile; returns f32."""
    # 1x1 expand + folded-BN shift + ReLU6 (MXU bf16, f32 accumulate).
    e = jnp.dot(x.astype(jnp.bfloat16), w1_ref[...],
                preferred_element_type=jnp.float32)
    e = jnp.clip(e + b1_ref[...], 0.0, 6.0)
    # 3x3 depthwise (padding=1) + folded-BN shift + ReLU6 (VPU f32 + XLU rolls).
    d = _depthwise3x3(e, wd_ref, row_ok, col_ok, H, W)
    d = jnp.clip(d + bd_ref[...], 0.0, 6.0)
    # 1x1 project + folded-BN shift (no activation), optional residual add.
    p = jnp.dot(d.astype(jnp.bfloat16), w3_ref[...],
                preferred_element_type=jnp.float32)
    p = p + b3_ref[...]
    if use_add:
        p = p + x
    return p


def _stage_kernel(x_ref, *refs, H, W, use_adds, emit_pool):
    """All `reps` blocks of one stage on one image, flattened (H*W, C)."""
    nb = len(use_adds)
    wrefs = refs[:6 * nb]
    o_ref = refs[6 * nb]
    M = H * W

    # In-kernel spatial indices (no HBM hid/wid inputs).  f32 math avoids
    # integer div/mod lowering; values are exact for M < 2^24.
    m_idx = jax.lax.broadcasted_iota(jnp.float32, (M, 1), 0)
    hid = jnp.floor((m_idx + 0.5) / W)
    wid = m_idx - hid * W
    row_ok = {-1: hid > 0.5, 1: hid < (H - 1.5)}
    col_ok = {-1: wid > 0.5, 1: wid < (W - 1.5)}

    x = x_ref[...].astype(jnp.float32)
    for b in range(nb):
        w1, b1, wd, bd, w3, b3 = wrefs[6 * b:6 * b + 6]
        x = _invres_apply(x, w1, b1, wd, bd, w3, b3,
                          row_ok, col_ok, H, W, use_adds[b])
    if emit_pool:
        # Fused AdaptiveAvgPool2d(1): only the (1, Cout) mean leaves the chip.
        o_ref[...] = jnp.mean(x, axis=0, keepdims=True).astype(o_ref.dtype)
    else:
        o_ref[...] = x.astype(o_ref.dtype)


# ------------------------------ wrappers ---------------------------------

def matmul_bias(x, w, b, *, out_dtype, tm=1024):
    # x: (M, K), w: (K, N), b: (N,).  M-tiled grid -> pipelined DMA/compute.
    M, K = x.shape
    Nc = w.shape[1]
    b2 = b.reshape(1, Nc).astype(jnp.float32)
    if M > tm:
        bm, grid = tm, (pl.cdiv(M, tm),)
    else:
        bm, grid = M, (1,)
    return pl.pallas_call(
        _mm_bias_kernel,
        grid=grid,
        in_specs=[pl.BlockSpec((bm, K), lambda i: (i, 0)),
                  pl.BlockSpec((K, Nc), lambda i: (0, 0)),
                  pl.BlockSpec((1, Nc), lambda i: (0, 0))],
        out_specs=pl.BlockSpec((bm, Nc), lambda i: (i, 0)),
        out_shape=jax.ShapeDtypeStruct((M, Nc), out_dtype),
        compiler_params=pltpu.CompilerParams(
            dimension_semantics=("parallel",),
            vmem_limit_bytes=VMEM_LIMIT),
    )(x, w, b2)


def stage_call(x, H, W, stage, *, emit_pool=False):
    # x: (N, H*W, Cin) bf16 -> (N, H*W, Cout) bf16, or (N, 1, Cout) f32 pooled.
    N, M, Cin = x.shape
    blocks = stage['blocks']
    Cout = blocks[-1]['w3'].shape[1]
    use_adds = tuple(b['use_add'] for b in blocks)
    kern = functools.partial(_stage_kernel, H=H, W=W, use_adds=use_adds,
                             emit_pool=emit_pool)

    in_specs = [pl.BlockSpec((None, M, Cin), lambda n: (n, 0, 0))]
    args = [x]
    for blk in blocks:
        for name in ('w1', 'b1', 'wd', 'bd', 'w3', 'b3'):
            w = blk[name]
            in_specs.append(pl.BlockSpec(w.shape, lambda n: (0, 0)))
            args.append(w)

    Mo = 1 if emit_pool else M
    out_dtype = jnp.float32 if emit_pool else jnp.bfloat16
    return pl.pallas_call(
        kern,
        grid=(N,),
        in_specs=in_specs,
        out_specs=pl.BlockSpec((None, Mo, Cout), lambda n: (n, 0, 0)),
        out_shape=jax.ShapeDtypeStruct((N, Mo, Cout), out_dtype),
        compiler_params=pltpu.CompilerParams(
            dimension_semantics=("parallel",),
            vmem_limit_bytes=VMEM_LIMIT),
    )(*args)


def tail_fused(pooled, w2, b2, wf, bf):
    N, K = pooled.shape
    C1 = w2.shape[1]
    C2 = wf.shape[1]
    return pl.pallas_call(
        _tail_kernel,
        grid=(1,),
        in_specs=[pl.BlockSpec((N, K), lambda i: (0, 0)),
                  pl.BlockSpec((K, C1), lambda i: (0, 0)),
                  pl.BlockSpec((1, C1), lambda i: (0, 0)),
                  pl.BlockSpec((C1, C2), lambda i: (0, 0)),
                  pl.BlockSpec((1, C2), lambda i: (0, 0))],
        out_specs=pl.BlockSpec((N, C2), lambda i: (0, 0)),
        out_shape=jax.ShapeDtypeStruct((N, C2), jnp.float32),
        compiler_params=pltpu.CompilerParams(
            dimension_semantics=("arbitrary",),
            vmem_limit_bytes=VMEM_LIMIT),
    )(pooled, w2, b2, wf, bf)


# ------------------------- parameter initialization ----------------------

def _conv_w(key, fan_in, shape):
    return jax.random.normal(key, shape, jnp.float32) / jnp.sqrt(float(fan_in))


def _bn_fold(key, C):
    k1, k2, k3, k4 = jax.random.split(key, 4)
    gamma = 1.0 + 0.1 * jax.random.normal(k1, (C,), jnp.float32)
    beta = 0.1 * jax.random.normal(k2, (C,), jnp.float32)
    mean = 0.1 * jax.random.normal(k3, (C,), jnp.float32)
    var = jnp.abs(1.0 + 0.1 * jax.random.normal(k4, (C,), jnp.float32))
    scale = gamma / jnp.sqrt(var + BN_EPS)
    shift = beta - mean * scale
    return scale, shift


def init_params(key, in_channels, num_classes):
    keys = iter(jax.random.split(key, 256))
    p = {'num_classes': num_classes}

    # head: Conv2d(in, 32, k=3, s=2, p=0, bias=True); no BN / ReLU6 after it.
    p['head_w'] = _conv_w(next(keys), in_channels * 9,
                          (3, 3, in_channels, 32)
                          ).reshape(9 * in_channels, 32).astype(jnp.bfloat16)
    p['head_b'] = 0.01 * jax.random.normal(next(keys), (32,), jnp.float32)

    stages = []
    cin = 32
    for (expand, cout, reps, stride) in HYPER:
        blocks = []
        for j in range(reps):
            s = 1 if j != reps - 1 else stride   # matches the PyTorch loop
            ce = expand * cin
            w1 = _conv_w(next(keys), cin, (cin, ce))
            wd = _conv_w(next(keys), 9, (9, ce))
            w3 = _conv_w(next(keys), ce, (ce, cout))
            s1, b1 = _bn_fold(next(keys), ce)
            sd, bd = _bn_fold(next(keys), ce)
            s3, b3 = _bn_fold(next(keys), cout)
            blocks.append({
                'use_add': (cin == cout and s == 1),
                # BN scale folded into the conv weights; only the shift remains.
                'w1': (w1 * s1[None, :]).astype(jnp.bfloat16),
                'b1': b1.reshape(1, ce),
                'wd': wd * sd[None, :],                      # f32 (VPU math)
                'bd': bd.reshape(1, ce),
                'w3': (w3 * s3[None, :]).astype(jnp.bfloat16),
                'b3': b3.reshape(1, cout),
            })
            cin = cout
        stages.append({'stride': stride, 'blocks': blocks})
    p['stages'] = stages

    p['conv2_w'] = _conv_w(next(keys), 320, (320, 1280)).astype(jnp.bfloat16)
    p['conv2_b'] = (0.01 * jax.random.normal(next(keys), (1280,), jnp.float32)
                    ).reshape(1, 1280)

    # fc padded to a lane-dense 128-column output; sliced after the kernel.
    ncp = max(128, ((num_classes + 127) // 128) * 128)
    fcw = _conv_w(next(keys), 1280, (1280, num_classes))
    fcb = 0.01 * jax.random.normal(next(keys), (num_classes,), jnp.float32)
    p['fc_w'] = jnp.zeros((1280, ncp), jnp.float32
                          ).at[:, :num_classes].set(fcw).astype(jnp.bfloat16)
    p['fc_b'] = jnp.zeros((1, ncp), jnp.float32).at[0, :num_classes].set(fcb)
    return p


# ------------------------------- forward ---------------------------------

def mobilenetv2_forward(params, x_nchw):
    # NCHW -> NHWC, cast to bf16 once (halves head im2col HBM traffic).
    x = jnp.transpose(x_nchw, (0, 2, 3, 1)).astype(jnp.bfloat16)
    N, H, W, Cin = x.shape

    # head: 3x3 stride-2 pad-0 conv via im2col + tiled Pallas matmul (+bias).
    Ho = (H - 3) // 2 + 1
    Wo = (W - 3) // 2 + 1
    cols = []
    for dy in range(3):
        for dx in range(3):
            cols.append(x[:, dy:dy + 2 * Ho - 1:2, dx:dx + 2 * Wo - 1:2, :])
    pmat = jnp.concatenate(cols, axis=-1).reshape(N * Ho * Wo, 9 * Cin)
    h = matmul_bias(pmat, params['head_w'], params['head_b'],
                    out_dtype=jnp.bfloat16)
    h = h.reshape(N, Ho * Wo, 32)
    Hh, Wh = Ho, Wo

    # backbone: one fused pallas_call per stage (all reps inside the kernel).
    n_stages = len(params['stages'])
    for si, stage in enumerate(params['stages']):
        emit_pool = (si == n_stages - 1)        # last stage also does the pool
        out = stage_call(h, Hh, Wh, stage, emit_pool=emit_pool)
        if emit_pool:
            h = out                             # (N, 1, 320) f32 pooled
            break
        s = stage['stride']
        if s > 1:
            # TODO(synk): stride-2 subsample kept as an XLA slice on the small
            # Cout output; in-kernel strided row gather left out for robustness.
            Cout = out.shape[-1]
            out = out.reshape(N, Hh, Wh, Cout)[:, ::s, ::s, :]
            Hh = (Hh - 1) // s + 1
            Wh = (Wh - 1) // s + 1
            out = out.reshape(N, Hh * Wh, Cout)
        h = out

    # tail: AdaptiveAvgPool2d(1) already fused into the last stage kernel and
    # commuted in front of the linear 1x1 conv2 (exact: no nonlinearity there),
    # then fused conv2(+bias) + fc(+bias) kernel with lane-dense (128) output.
    pooled = h.reshape(N, -1)                    # (N, 320) f32
    logits = tail_fused(pooled.astype(jnp.bfloat16), params['conv2_w'],
                        params['conv2_b'], params['fc_w'], params['fc_b'])
    return logits[:, :params['num_classes']]


if __name__ == "__main__":
    key = jax.random.PRNGKey(0)
    kp, kx = jax.random.split(key)
    in_channels, num_classes = 3, 10
    params = init_params(kp, in_channels, num_classes)
    # small input consistent with the module (NCHW, like the PyTorch forward)
    x = jax.random.normal(kx, (2, in_channels, 32, 32), jnp.float32)
    out = mobilenetv2_forward(params, x)
    out = jax.block_until_ready(out)
    assert out.shape == (2, num_classes)
    assert bool(jnp.all(jnp.isfinite(out)))
    print("KERNEL_OK")
</pallas_src>

<mosaic_0001>
module attributes {stable_mosaic.version = 11 : i64} {
  func.func @_mm_bias_kernel(%arg0: i32, %arg1: memref<450x27xbf16, #tpu.memory_space<vmem>>, %arg2: memref<27x32xbf16, #tpu.memory_space<vmem>>, %arg3: memref<1x32xf32, #tpu.memory_space<vmem>>, %arg4: memref<450x32xbf16, #tpu.memory_space<vmem>>) attributes {dimension_semantics = [#tpu.dimension_semantics<parallel>], iteration_bounds = array<i64: 1>, scalar_prefetch = 0 : i64, scratch_operands = 0 : i64, tpu.core_type = #tpu.core_type<tc>, window_params = [{transform_indices = @transform_0, window_bounds = array<i64: 450, 27>}, {pipeline_mode = #tpu.pipeline_mode<synchronous>, transform_indices = @transform_1, window_bounds = array<i64: 27, 32>}, {pipeline_mode = #tpu.pipeline_mode<synchronous>, transform_indices = @transform_2, window_bounds = array<i64: 1, 32>}, {transform_indices = @transform_3, window_bounds = array<i64: 450, 32>}]} {
    %c0 = arith.constant 0 : index
    %c0_0 = arith.constant 0 : index
    %0 = vector.load %arg1[%c0, %c0_0] : memref<450x27xbf16, #tpu.memory_space<vmem>>, vector<450x27xbf16>
    %c0_1 = arith.constant 0 : index
    %c0_2 = arith.constant 0 : index
    %1 = vector.load %arg2[%c0_1, %c0_2] : memref<27x32xbf16, #tpu.memory_space<vmem>>, vector<27x32xbf16>
    %cst = arith.constant dense<0.000000e+00> : vector<450x32xf32>
    %2 = tpu.matmul %0, %1, %cst {dimension_numbers = #tpu.dot_dimension_numbers<[1], [0], [0], [1], [0, 0, 1, 1], [], []>} : vector<450x27xbf16>, vector<27x32xbf16>, vector<450x32xf32> -> vector<450x32xf32>
    %c0_3 = arith.constant 0 : index
    %c0_4 = arith.constant 0 : index
    %3 = vector.load %arg3[%c0_3, %c0_4] : memref<1x32xf32, #tpu.memory_space<vmem>>, vector<1x32xf32>
    %4 = vector.broadcast %3 : vector<1x32xf32> to vector<450x32xf32>
    %5 = arith.addf %2, %4 : vector<450x32xf32>
    %6 = arith.truncf %5 : vector<450x32xf32> to vector<450x32xbf16>
    %c0_5 = arith.constant 0 : index
    %c0_6 = arith.constant 0 : index
    %7 = vector.load %arg4[%c0_5, %c0_6] : memref<450x32xbf16, #tpu.memory_space<vmem>>, vector<450x32xbf16>
    tpu.vector_store %arg4[%c0_5, %c0_6], %6 {strides = array<i32>} : memref<450x32xbf16, #tpu.memory_space<vmem>>, vector<450x32xbf16>,
    return
  }
  func.func @transform_0(%arg0: i32) -> (i32, i32) {
    %c0_i32 = arith.constant 0 : i32
    %c0_i32_0 = arith.constant 0 : i32
    return %arg0, %c0_i32 : i32, i32
  }
  func.func @transform_1(%arg0: i32) -> (i32, i32) {
    %c0_i32 = arith.constant 0 : i32
    %c0_i32_0 = arith.constant 0 : i32
    %c0_i32_1 = arith.constant 0 : i32
    return %c0_i32, %c0_i32_0 : i32, i32
  }
  func.func @transform_2(%arg0: i32) -> (i32, i32) {
    %c0_i32 = arith.constant 0 : i32
    %c0_i32_0 = arith.constant 0 : i32
    %c0_i32_1 = arith.constant 0 : i32
    return %c0_i32, %c0_i32_0 : i32, i32
  }
  func.func @transform_3(%arg0: i32) -> (i32, i32) {
    %c0_i32 = arith.constant 0 : i32
    %c0_i32_0 = arith.constant 0 : i32
    return %arg0, %c0_i32 : i32, i32
  }
}

</mosaic_0001>

<llo_original>
// kernel: tpu_custom_call.1
$region0: #{tpu_custom_call.1}
  #allocation0 [shape = 'u32[]', space=smem, size = 0x4, offset = 0x4, fixed_abs, tag = 'smem constant byte address 0x4 - core index']
  #allocation1 [shape = 'u32[144,128]{1,0:T(1,128)}', space=vmem, size = 0x12000, scoped, tag = 'internal scratch']
  %s0 = inlined_call_operand.vmem [shape: bf16[450,27], index: 0, kind: input, shape index: {}]
  %s1 = inlined_call_operand.vmem [shape: bf16[27,32], index: 1, kind: input, shape index: {}]
  %s2 = inlined_call_operand.vmem [shape: f32[1,32], index: 2, kind: input, shape index: {}]
  %s3 = inlined_call_operand.vmem [shape: bf16[450,32], index: 3, kind: output, shape index: {}]
  %s4 = sld [smem:[#allocation0]]
  $region22: #{tpu_custom_call.1} parent=0
    _
  %s6 = ssub.s32 1, %s4
  %s7 = scalar_select 0, %s6, %s4
  // Predicated region
  $region2: #{tpu_custom_call.1} parent=0 // pred_check
    _
  $region3: #{tpu_custom_call.1} parent=0 // pred_check_branch
    %9 = sbr.rel (0) target = $region5
  $region4: #{tpu_custom_call.1} parent=0 // pred_region
    _
  $region5: #{tpu_custom_call.1} parent=0 // pred_fallthru
    _
  // Predicated region
  $region6: #{tpu_custom_call.1} parent=0 // pred_check
    _
  $region7: #{tpu_custom_call.1} parent=0 // pred_check_branch
    %11 = sbr.rel (0) target = $region9
  $region8: #{tpu_custom_call.1} parent=0 // pred_region
    _
  $region9: #{tpu_custom_call.1} parent=0 // pred_fallthru
    _
  // Predicated region
  $region10: #{tpu_custom_call.1} parent=0 // pred_check
    _
  $region11: #{tpu_custom_call.1} parent=0 // pred_check_branch
    %13 = sbr.rel (0) target = $region13
  $region12: #{tpu_custom_call.1} parent=0 // pred_region
    _
  $region13: #{tpu_custom_call.1} parent=0 // pred_fallthru
    _
  %v15 = vld [vmem:[%s0] sm:$0xf]
  %v16 = vld [vmem:[%s0 + $0x4] sm:$0xf]
  %v17 = vld [vmem:[%s0 + $0x8] sm:$0xf]
  %v18 = vld [vmem:[%s0 + $0xc] sm:$0xf]
  %v19 = vld [vmem:[%s0 + $0x10] sm:$0xf]
  %v20 = vld [vmem:[%s0 + $0x14] sm:$0xf]
  %v21 = vld [vmem:[%s0 + $0x18] sm:$0xf]
  %v22 = vld [vmem:[%s0 + $0x1c] sm:$0xf]
  %v23 = vld [vmem:[%s0 + $0x20] sm:$0xf]
  %v24 = vld [vmem:[%s0 + $0x24] sm:$0xf]
  %v25 = vld [vmem:[%s0 + $0x28] sm:$0xf]
  %v26 = vld [vmem:[%s0 + $0x2c] sm:$0xf]
  %v27 = vld [vmem:[%s0 + $0x30] sm:$0xf]
  %v28 = vld [vmem:[%s0 + $0x34] sm:$0xf]
  %v29 = vld [vmem:[%s0 + $0x38] sm:$0xf]
  %v30 = vld [vmem:[%s0 + $0x3c] sm:$0xf]
  %v31 = vld [vmem:[%s0 + $0x40] sm:$0xf]
  %v32 = vld [vmem:[%s0 + $0x44] sm:$0xf]
  %v33 = vld [vmem:[%s0 + $0x48] sm:$0xf]
  %v34 = vld [vmem:[%s0 + $0x4c] sm:$0xf]
  %v35 = vld [vmem:[%s0 + $0x50] sm:$0xf]
  %v36 = vld [vmem:[%s0 + $0x54] sm:$0xf]
  %v37 = vld [vmem:[%s0 + $0x58] sm:$0xf]
  %v38 = vld [vmem:[%s0 + $0x5c] sm:$0xf]
  %v39 = vld [vmem:[%s0 + $0x60] sm:$0xf]
  %v40 = vld [vmem:[%s0 + $0x64] sm:$0xf]
  %v41 = vld [vmem:[%s0 + $0x68] sm:$0xf]
  %v42 = vld [vmem:[%s0 + $0x6c] sm:$0xf]
  %v43 = vld [vmem:[%s0 + $0x70] sm:$0xf]
  %v44 = vld [vmem:[%s0 + $0x74] sm:$0xf]
  %v45 = vld [vmem:[%s0 + $0x78] sm:$0xf]
  %v46 = vld [vmem:[%s0 + $0x7c] sm:$0xf]
  %v47 = vld [vmem:[%s0 + $0x80] sm:$0xf]
  %v48 = vld [vmem:[%s0 + $0x84] sm:$0xf]
  %v49 = vld [vmem:[%s0 + $0x88] sm:$0xf]
  %v50 = vld [vmem:[%s0 + $0x8c] sm:$0xf]
  %v51 = vld [vmem:[%s0 + $0x90] sm:$0xf]
  %v52 = vld [vmem:[%s0 + $0x94] sm:$0xf]
  %v53 = vld [vmem:[%s0 + $0x98] sm:$0xf]
  %v54 = vld [vmem:[%s0 + $0x9c] sm:$0xf]
  %v55 = vld [vmem:[%s0 + $0xa0] sm:$0xf]
  %v56 = vld [vmem:[%s0 + $0xa4] sm:$0xf]
  %v57 = vld [vmem:[%s0 + $0xa8] sm:$0xf]
  %v58 = vld [vmem:[%s0 + $0xac] sm:$0xf]
  %v59 = vld [vmem:[%s0 + $0xb0] sm:$0xf]
  %v60 = vld [vmem:[%s0 + $0xb4] sm:$0xf]
  %v61 = vld [vmem:[%s0 + $0xb8] sm:$0xf]
  %v62 = vld [vmem:[%s0 + $0xbc] sm:$0xf]
  %v63 = vld [vmem:[%s0 + $0xc0] sm:$0xf]
  %v64 = vld [vmem:[%s0 + $0xc4] sm:$0xf]
  %v65 = vld [vmem:[%s0 + $0xc8] sm:$0xf]
  %v66 = vld [vmem:[%s0 + $0xcc] sm:$0xf]
  %v67 = vld [vmem:[%s0 + $0xd0] sm:$0xf]
  %v68 = vld [vmem:[%s0 + $0xd4] sm:$0xf]
  %v69 = vld [vmem:[%s0 + $0xd8] sm:$0xf]
  %v70 = vld [vmem:[%s0 + $0xdc] sm:$0xf]
  %v71 = vld [vmem:[%s0 + $0xe0] sm:$0x1]
  %v72 = vld [vmem:[%s1] sm:$0xf]
  %v73 = vld [vmem:[%s1 + $0x4] sm:$0xf]
  %v74 = vld [vmem:[%s1 + $0x8] sm:$0xf]
  %v75 = vld [vmem:[%s1 + $0xc] sm:$0x3]
  %v76 = vld [vmem:[%s2] sm:$0x1]
  %v78 = vlaneseq
  %v79 = vshrl.u32 %v78, 7
  %v80 = vsub.s32 0, %v79
  %v81 = vrot.slane %v76, %v80
  %v140 = vunpack.c.l.b16 %v15
  %v141 = vunpack.c.l.b16 %v16
  %v142 = vunpack.c.l.b16 %v17
  %v143 = vunpack.c.l.b16 %v18
  %v144 = vunpack.c.l.b16 %v19
  %v145 = vunpack.c.l.b16 %v20
  %v146 = vunpack.c.l.b16 %v21
  %v147 = vunpack.c.l.b16 %v22
  %v148 = vunpack.c.l.b16 %v23
  %v149 = vunpack.c.l.b16 %v24
  %v150 = vunpack.c.l.b16 %v25
  %v151 = vunpack.c.l.b16 %v26
  %v152 = vunpack.c.l.b16 %v27
  %v153 = vunpack.c.l.b16 %v28
  %v154 = vunpack.c.l.b16 %v29
  %v155 = vunpack.c.l.b16 %v30
  %v156 = vunpack.c.l.b16 %v31
  %v157 = vunpack.c.l.b16 %v32
  %v158 = vunpack.c.l.b16 %v33
  %v159 = vunpack.c.l.b16 %v34
  %v160 = vunpack.c.l.b16 %v35
  %v161 = vunpack.c.l.b16 %v36
  %v162 = vunpack.c.l.b16 %v37
  %v163 = vunpack.c.l.b16 %v38
  %v164 = vunpack.c.l.b16 %v39
  %v165 = vunpack.c.l.b16 %v40
  %v166 = vunpack.c.l.b16 %v41
  %v167 = vunpack.c.l.b16 %v42
  %v168 = vunpack.c.l.b16 %v43
  %v169 = vunpack.c.l.b16 %v44
  %v170 = vunpack.c.l.b16 %v45
  %v171 = vunpack.c.l.b16 %v46
  %v172 = vunpack.c.l.b16 %v47
  %v173 = vunpack.c.l.b16 %v48
  %v174 = vunpack.c.l.b16 %v49
  %v175 = vunpack.c.l.b16 %v50
  %v176 = vunpack.c.l.b16 %v51
  %v177 = vunpack.c.l.b16 %v52
  %v178 = vunpack.c.l.b16 %v53
  %v179 = vunpack.c.l.b16 %v54
  %v180 = vunpack.c.l.b16 %v55
  %v181 = vunpack.c.l.b16 %v56
  %v182 = vunpack.c.l.b16 %v57
  %v183 = vunpack.c.l.b16 %v58
  %v184 = vunpack.c.l.b16 %v59
  %v185 = vunpack.c.l.b16 %v60
  %v186 = vunpack.c.l.b16 %v61
  %v187 = vunpack.c.l.b16 %v62
  %v188 = vunpack.c.l.b16 %v63
  %v189 = vunpack.c.l.b16 %v64
  %v190 = vunpack.c.l.b16 %v65
  %v191 = vunpack.c.l.b16 %v66
  %v192 = vunpack.c.l.b16 %v67
  %v193 = vunpack.c.l.b16 %v68
  %v194 = vunpack.c.l.b16 %v69
  %v195 = vunpack.c.l.b16 %v70
  %v196 = vunpack.c.l.b16 %v71
  %v197 = vpack.c.b16 %v141, %v140
  %v198 = vpack.c.b16 %v143, %v142
  %v199 = vpack.c.b16 %v145, %v144
  %v200 = vpack.c.b16 %v147, %v146
  %v201 = vpack.c.b16 %v149, %v148
  %v202 = vpack.c.b16 %v151, %v150
  %v203 = vpack.c.b16 %v153, %v152
  %v204 = vpack.c.b16 %v155, %v154
  %v205 = vpack.c.b16 %v157, %v156
  %v206 = vpack.c.b16 %v159, %v158
  %v207 = vpack.c.b16 %v161, %v160
  %v208 = vpack.c.b16 %v163, %v162
  %v209 = vpack.c.b16 %v165, %v164
  %v210 = vpack.c.b16 %v167, %v166
  %v211 = vpack.c.b16 %v169, %v168
  %v212 = vpack.c.b16 %v171, %v170
  %v213 = vpack.c.b16 %v173, %v172
  %v214 = vpack.c.b16 %v175, %v174
  %v215 = vpack.c.b16 %v177, %v176
  %v216 = vpack.c.b16 %v179, %v178
  %v217 = vpack.c.b16 %v181, %v180
  %v218 = vpack.c.b16 %v183, %v182
  %v219 = vpack.c.b16 %v185, %v184
  %v220 = vpack.c.b16 %v187, %v186
  %v221 = vpack.c.b16 %v189, %v188
  %v222 = vpack.c.b16 %v191, %v190
  %v223 = vpack.c.b16 %v193, %v192
  %v224 = vpack.c.b16 %v195, %v194
  %v225 = vpack.c.b16 %v196, %v196
  %v230 = vunpack.c.l.b16 %v72
  %v231 = vunpack.c.l.b16 %v73
  %v232 = vunpack.c.l.b16 %v74
  %v233 = vunpack.c.l.b16 %v75
  %v234 = vpack.c.b16 %v231, %v230
  %v235 = vpack.c.b16 %v233, %v232
  %vm237 = vcmask 220160
  %v239 = vsel %vm237, %v197, 0
  %v242 = vsel %vm237, %v198, 0
  %v245 = vsel %vm237, %v199, 0
  %v248 = vsel %vm237, %v200, 0
  %v251 = vsel %vm237, %v201, 0
  %v254 = vsel %vm237, %v202, 0
  %v257 = vsel %vm237, %v203, 0
  %v260 = vsel %vm237, %v204, 0
  %v263 = vsel %vm237, %v205, 0
  %v266 = vsel %vm237, %v206, 0
  %v269 = vsel %vm237, %v207, 0
  %v272 = vsel %vm237, %v208, 0
  %v275 = vsel %vm237, %v209, 0
  %v278 = vsel %vm237, %v210, 0
  %v281 = vsel %vm237, %v211, 0
  %v284 = vsel %vm237, %v212, 0
  %v287 = vsel %vm237, %v213, 0
  %v290 = vsel %vm237, %v214, 0
  %v293 = vsel %vm237, %v215, 0
  %v296 = vsel %vm237, %v216, 0
  %v299 = vsel %vm237, %v217, 0
  %v302 = vsel %vm237, %v218, 0
  %v305 = vsel %vm237, %v219, 0
  %v308 = vsel %vm237, %v220, 0
  %v311 = vsel %vm237, %v221, 0
  %v314 = vsel %vm237, %v222, 0
  %v317 = vsel %vm237, %v223, 0
  %v320 = vsel %vm237, %v224, 0
  %v323 = vsel %vm237, %v225, 0
  %vm325 = vcmask 1044480
  %vm326 = vcmask 1045504
  %v327 = vsel %vm325, 4294967295, 65535
  %v328 = vsel %vm326, %v327, 0
  %v330 = vand.u32 %v235, %v328
  %332 = vmatprep.subr.bf16.mxu0 0
  %333 = vmatpush1.bf16.msra.mxu0 0
  %334 = vmatprep.subr.bf16.mxu0 0
  %335 = vmatpush1.bf16.msra.mxu0 0
  %336 = vmatprep.subr.bf16.mxu0 0
  %337 = vmatpush1.bf16.msra.mxu0 0
  %338 = vmatprep.subr.bf16.mxu0 0
  %339 = vmatpush1.bf16.msra.mxu0 0
  %340 = vmatprep.subr.bf16.mxu0 0
  %341 = vmatpush1.bf16.msra.mxu0 0
  %342 = vmatprep.subr.bf16.mxu0 0
  %343 = vmatpush1.bf16.msra.mxu0 0
  %344 = vmatprep.subr.bf16.mxu0 0
  %345 = vmatpush1.bf16.msra.mxu0 %v330
  %346 = vmatprep.subr.bf16.mxu0 0
  %347 = vmatpush1.bf16.msra.mxu0 %v234
  %348 = vmatprep.subr.bf16.mxu0 0
  %349 = vmatpush2.bf16.msra.mxu0 0
  %350 = vmatprep.subr.bf16.mxu0 0
  %351 = vmatpush2.bf16.msra.mxu0 0
  %352 = vmatprep.subr.bf16.mxu0 0
  %353 = vmatpush2.bf16.msra.mxu0 0
  %354 = vmatprep.subr.bf16.mxu0 0
  %355 = vmatpush2.bf16.msra.mxu0 0
  %356 = vmatprep.subr.bf16.mxu0 0
  %357 = vmatpush2.bf16.msra.mxu0 0
  %358 = vmatprep.subr.bf16.mxu0 0
  %359 = vmatpush2.bf16.msra.mxu0 0
  %360 = vmatprep.subr.bf16.mxu0 0
  %361 = vmatpush2.bf16.msra.mxu0 0
  %362 = vmatprep.subr.bf16.mxu0 0
  %363 = vmatpush2.bf16.msra.mxu0 0
  %364 = vmatprep.mubr.bf16.mxu0 0
  %365 = vmatmul.mubr.bf16.gmra.mxu0 %v239
  %v366 = vpop.f32.mrf.mxu0
  %v367 = vadd.f32 %v81, %v366
  %v368 = vpop.f32.mrf.mxu0
  %v369 = vpop.f32.mrf.mxu0
  %v370 = vadd.f32 %v81, %v369
  %v371 = vpop.f32.mrf.mxu0
  %372 = vmatprep.mubr.bf16.mxu0 0
  %373 = vmatmul.mubr.bf16.gmra.mxu0 %v242
  %v374 = vpop.f32.mrf.mxu0
  %v375 = vadd.f32 %v81, %v374
  %v376 = vpop.f32.mrf.mxu0
  %v377 = vpop.f32.mrf.mxu0
  %v378 = vadd.f32 %v81, %v377
  %v379 = vpop.f32.mrf.mxu0
  %380 = vmatprep.mubr.bf16.mxu0 0
  %381 = vmatmul.mubr.bf16.gmra.mxu0 %v245
  %v382 = vpop.f32.mrf.mxu0
  %v383 = vadd.f32 %v81, %v382
  %v384 = vpop.f32.mrf.mxu0
  %v385 = vpop.f32.mrf.mxu0
  %v386 = vadd.f32 %v81, %v385
  %v387 = vpop.f32.mrf.mxu0
  %388 = vmatprep.mubr.bf16.mxu0 0
  %389 = vmatmul.mubr.bf16.gmra.mxu0 %v248
  %v390 = vpop.f32.mrf.mxu0
  %v391 = vadd.f32 %v81, %v390
  %v392 = vpop.f32.mrf.mxu0
  %v393 = vpop.f32.mrf.mxu0
  %v394 = vadd.f32 %v81, %v393
  %v395 = vpop.f32.mrf.mxu0
  %396 = vmatprep.mubr.bf16.mxu0 0
  %397 = vmatmul.mubr.bf16.gmra.mxu0 %v251
  %v398 = vpop.f32.mrf.mxu0
  %v399 = vadd.f32 %v81, %v398
  %v400 = vpop.f32.mrf.mxu0
  %v401 = vpop.f32.mrf.mxu0
  %v402 = vadd.f32 %v81, %v401
  %v403 = vpop.f32.mrf.mxu0
  %404 = vmatprep.mubr.bf16.mxu0 0
  %405 = vmatmul.mubr.bf16.gmra.mxu0 %v254
  %v406 = vpop.f32.mrf.mxu0
  %v407 = vadd.f32 %v81, %v406
  %v408 = vpop.f32.mrf.mxu0
  %v409 = vpop.f32.mrf.mxu0
  %v410 = vadd.f32 %v81, %v409
  %v411 = vpop.f32.mrf.mxu0
  %412 = vmatprep.mubr.bf16.mxu0 0
  %413 = vmatmul.mubr.bf16.gmra.mxu0 %v257
  %v414 = vpop.f32.mrf.mxu0
  %v415 = vadd.f32 %v81, %v414
  %v416 = vpop.f32.mrf.mxu0
  %v417 = vpop.f32.mrf.mxu0
  %v418 = vadd.f32 %v81, %v417
  %v419 = vpop.f32.mrf.mxu0
  %420 = vmatprep.mubr.bf16.mxu0 0
  %421 = vmatmul.mubr.bf16.gmra.mxu0 %v260
  %v422 = vpop.f32.mrf.mxu0
  %v423 = vadd.f32 %v81, %v422
  %v424 = vpop.f32.mrf.mxu0
  %v425 = vpop.f32.mrf.mxu0
  %v426 = vadd.f32 %v81, %v425
  %v427 = vpop.f32.mrf.mxu0
  %428 = vmatprep.mubr.bf16.mxu0 0
  %429 = vmatmul.mubr.bf16.gmra.mxu0 %v263
  %v430 = vpop.f32.mrf.mxu0
  %v431 = vadd.f32 %v81, %v430
  %v432 = vpop.f32.mrf.mxu0
  %v433 = vpop.f32.mrf.mxu0
  %v434 = vadd.f32 %v81, %v433
  %v435 = vpop.f32.mrf.mxu0
  %436 = vmatprep.mubr.bf16.mxu0 0
  %437 = vmatmul.mubr.bf16.gmra.mxu0 %v266
  %v438 = vpop.f32.mrf.mxu0
  %v439 = vadd.f32 %v81, %v438
  %v440 = vpop.f32.mrf.mxu0
  %v441 = vpop.f32.mrf.mxu0
  %v442 = vadd.f32 %v81, %v441
  %v443 = vpop.f32.mrf.mxu0
  %444 = vmatprep.mubr.bf16.mxu0 0
  %445 = vmatmul.mubr.bf16.gmra.mxu0 %v269
  %v446 = vpop.f32.mrf.mxu0
  %v447 = vadd.f32 %v81, %v446
  %v448 = vpop.f32.mrf.mxu0
  %v449 = vpop.f32.mrf.mxu0
  %v450 = vadd.f32 %v81, %v449
  %v451 = vpop.f32.mrf.mxu0
  %452 = vmatprep.mubr.bf16.mxu0 0
  %453 = vmatmul.mubr.bf16.gmra.mxu0 %v272
  %v454 = vpop.f32.mrf.mxu0
  %v455 = vadd.f32 %v81, %v454
  %v456 = vpop.f32.mrf.mxu0
  %v457 = vpop.f32.mrf.mxu0
  %v458 = vadd.f32 %v81, %v457
  %v459 = vpop.f32.mrf.mxu0
  %460 = vmatprep.mubr.bf16.mxu0 0
  %461 = vmatmul.mubr.bf16.gmra.mxu0 %v275
  %v462 = vpop.f32.mrf.mxu0
  %v463 = vadd.f32 %v81, %v462
  %v464 = vpop.f32.mrf.mxu0
  %v465 = vpop.f32.mrf.mxu0
  %v466 = vadd.f32 %v81, %v465
  %v467 = vpop.f32.mrf.mxu0
  %468 = vmatprep.mubr.bf16.mxu0 0
  %469 = vmatmul.mubr.bf16.gmra.mxu0 %v278
  %v470 = vpop.f32.mrf.mxu0
  %v471 = vadd.f32 %v81, %v470
  %v472 = vpop.f32.mrf.mxu0
  %v473 = vpop.f32.mrf.mxu0
  %v474 = vadd.f32 %v81, %v473
  %v475 = vpop.f32.mrf.mxu0
  %476 = vmatprep.mubr.bf16.mxu0 0
  %477 = vmatmul.mubr.bf16.gmra.mxu0 %v281
  %v478 = vpop.f32.mrf.mxu0
  %v479 = vadd.f32 %v81, %v478
  %v480 = vpop.f32.mrf.mxu0
  %v481 = vpop.f32.mrf.mxu0
  %v482 = vadd.f32 %v81, %v481
  %v483 = vpop.f32.mrf.mxu0
  %484 = vmatprep.mubr.bf16.mxu0 0
  %485 = vmatmul.mubr.bf16.gmra.mxu0 %v284
  %v486 = vpop.f32.mrf.mxu0
  %v487 = vadd.f32 %v81, %v486
  %v488 = vpop.f32.mrf.mxu0
  %v489 = vpop.f32.mrf.mxu0
  %v490 = vadd.f32 %v81, %v489
  %v491 = vpop.f32.mrf.mxu0
  %492 = vmatprep.mubr.bf16.mxu0 0
  %493 = vmatmul.mubr.bf16.gmra.mxu0 %v287
  %v494 = vpop.f32.mrf.mxu0
  %v495 = vadd.f32 %v81, %v494
  %v496 = vpop.f32.mrf.mxu0
  %v497 = vpop.f32.mrf.mxu0
  %v498 = vadd.f32 %v81, %v497
  %v499 = vpop.f32.mrf.mxu0
  %500 = vmatprep.mubr.bf16.mxu0 0
  %501 = vmatmul.mubr.bf16.gmra.mxu0 %v290
  %v502 = vpop.f32.mrf.mxu0
  %v503 = vadd.f32 %v81, %v502
  %v504 = vpop.f32.mrf.mxu0
  %v505 = vpop.f32.mrf.mxu0
  %v506 = vadd.f32 %v81, %v505
  %v507 = vpop.f32.mrf.mxu0
  %508 = vmatprep.mubr.bf16.mxu0 0
  %509 = vmatmul.mubr.bf16.gmra.mxu0 %v293
  %v510 = vpop.f32.mrf.mxu0
  %v511 = vadd.f32 %v81, %v510
  %v512 = vpop.f32.mrf.mxu0
  %v513 = vpop.f32.mrf.mxu0
  %v514 = vadd.f32 %v81, %v513
  %v515 = vpop.f32.mrf.mxu0
  %516 = vmatprep.mubr.bf16.mxu0 0
  %517 = vmatmul.mubr.bf16.gmra.mxu0 %v296
  %v518 = vpop.f32.mrf.mxu0
  %v519 = vadd.f32 %v81, %v518
  %v520 = vpop.f32.mrf.mxu0
  %v521 = vpop.f32.mrf.mxu0
  %v522 = vadd.f32 %v81, %v521
  %v523 = vpop.f32.mrf.mxu0
  %524 = vmatprep.mubr.bf16.mxu0 0
  %525 = vmatmul.mubr.bf16.gmra.mxu0 %v299
  %v526 = vpop.f32.mrf.mxu0
  %v527 = vadd.f32 %v81, %v526
  %v528 = vpop.f32.mrf.mxu0
  %v529 = vpop.f32.mrf.mxu0
  %v530 = vadd.f32 %v81, %v529
  %v531 = vpop.f32.mrf.mxu0
  %532 = vmatprep.mubr.bf16.mxu0 0
  %533 = vmatmul.mubr.bf16.gmra.mxu0 %v302
  %v534 = vpop.f32.mrf.mxu0
  %v535 = vadd.f32 %v81, %v534
  %v536 = vpop.f32.mrf.mxu0
  %v537 = vpop.f32.mrf.mxu0
  %v538 = vadd.f32 %v81, %v537
  %v539 = vpop.f32.mrf.mxu0
  %540 = vmatprep.mubr.bf16.mxu0 0
  %541 = vmatmul.mubr.bf16.gmra.mxu0 %v305
  %v542 = vpop.f32.mrf.mxu0
  %v543 = vadd.f32 %v81, %v542
  %v544 = vpop.f32.mrf.mxu0
  %v545 = vpop.f32.mrf.mxu0
  %v546 = vadd.f32 %v81, %v545
  %v547 = vpop.f32.mrf.mxu0
  %548 = vmatprep.mubr.bf16.mxu0 0
  %549 = vmatmul.mubr.bf16.gmra.mxu0 %v308
  %v550 = vpop.f32.mrf.mxu0
  %v551 = vadd.f32 %v81, %v550
  %v552 = vpop.f32.mrf.mxu0
  %v553 = vpop.f32.mrf.mxu0
  %v554 = vadd.f32 %v81, %v553
  %v555 = vpop.f32.mrf.mxu0
  %556 = vmatprep.mubr.bf16.mxu0 0
  %557 = vmatmul.mubr.bf16.gmra.mxu0 %v311
  %v558 = vpop.f32.mrf.mxu0
  %v559 = vadd.f32 %v81, %v558
  %v560 = vpop.f32.mrf.mxu0
  %v561 = vpop.f32.mrf.mxu0
  %v562 = vadd.f32 %v81, %v561
  %v563 = vpop.f32.mrf.mxu0
  %564 = vmatprep.mubr.bf16.mxu0 0
  %565 = vmatmul.mubr.bf16.gmra.mxu0 %v314
  %v566 = vpop.f32.mrf.mxu0
  %v567 = vadd.f32 %v81, %v566
  %v568 = vpop.f32.mrf.mxu0
  %v569 = vpop.f32.mrf.mxu0
  %v570 = vadd.f32 %v81, %v569
  %v571 = vpop.f32.mrf.mxu0
  %572 = vmatprep.mubr.bf16.mxu0 0
  %573 = vmatmul.mubr.bf16.gmra.mxu0 %v317
  %v574 = vpop.f32.mrf.mxu0
  %v575 = vadd.f32 %v81, %v574
  %v576 = vpop.f32.mrf.mxu0
  %v577 = vpop.f32.mrf.mxu0
  %v578 = vadd.f32 %v81, %v577
  %v579 = vpop.f32.mrf.mxu0
  %580 = vmatprep.mubr.bf16.mxu0 0
  %581 = vmatmul.mubr.bf16.gmra.mxu0 %v320
  %v582 = vpop.f32.mrf.mxu0
  %v583 = vadd.f32 %v81, %v582
  %v584 = vpop.f32.mrf.mxu0
  %v585 = vpop.f32.mrf.mxu0
  %v586 = vadd.f32 %v81, %v585
  %v587 = vpop.f32.mrf.mxu0
  %588 = vmatprep.mubr.bf16.mxu0 0
  %589 = vmatmul.mubr.bf16.gmra.mxu0 %v323
  %v590 = vpop.f32.mrf.mxu0
  %v591 = vadd.f32 %v81, %v590
  %v592 = vpop.f32.mrf.mxu0
  %v593 = vpop.f32.mrf.mxu0
  %v594 = vpop.f32.mrf.mxu0
  %595 = vdwg.mxu0
  %v596 = vpack.c.bf16 %v370, %v367
  %v597 = vpack.c.bf16 %v378, %v375
  %v598 = vpack.c.bf16 %v386, %v383
  %v599 = vpack.c.bf16 %v394, %v391
  %v600 = vpack.c.bf16 %v402, %v399
  %v601 = vpack.c.bf16 %v410, %v407
  %v602 = vpack.c.bf16 %v418, %v415
  %v603 = vpack.c.bf16 %v426, %v423
  %v604 = vpack.c.bf16 %v434, %v431
  %v605 = vpack.c.bf16 %v442, %v439
  %v606 = vpack.c.bf16 %v450, %v447
  %v607 = vpack.c.bf16 %v458, %v455
  %v608 = vpack.c.bf16 %v466, %v463
  %v609 = vpack.c.bf16 %v474, %v471
  %v610 = vpack.c.bf16 %v482, %v479
  %v611 = vpack.c.bf16 %v490, %v487
  %v612 = vpack.c.bf16 %v498, %v495
  %v613 = vpack.c.bf16 %v506, %v503
  %v614 = vpack.c.bf16 %v514, %v511
  %v615 = vpack.c.bf16 %v522, %v519
  %v616 = vpack.c.bf16 %v530, %v527
  %v617 = vpack.c.bf16 %v538, %v535
  %v618 = vpack.c.bf16 %v546, %v543
  %v619 = vpack.c.bf16 %v554, %v551
  %v620 = vpack.c.bf16 %v562, %v559
  %v621 = vpack.c.bf16 %v570, %v567
  %v622 = vpack.c.bf16 %v578, %v575
  %v623 = vpack.c.bf16 %v586, %v583
  %v624 = vpack.c.bf16 %v591, %v591
  %v654 = vunpack.c.l.b16 %v596
  %v655 = vunpack.c.h.b16 %v596
  %v656 = vunpack.c.l.b16 %v597
  %v657 = vunpack.c.h.b16 %v597
  %v658 = vunpack.c.l.b16 %v598
  %v659 = vunpack.c.h.b16 %v598
  %v660 = vunpack.c.l.b16 %v599
  %v661 = vunpack.c.h.b16 %v599
  %v662 = vunpack.c.l.b16 %v600
  %v663 = vunpack.c.h.b16 %v600
  %v664 = vunpack.c.l.b16 %v601
  %v665 = vunpack.c.h.b16 %v601
  %v666 = vunpack.c.l.b16 %v602
  %v667 = vunpack.c.h.b16 %v602
  %v668 = vunpack.c.l.b16 %v603
  %v669 = vunpack.c.h.b16 %v603
  %v670 = vunpack.c.l.b16 %v604
  %v671 = vunpack.c.h.b16 %v604
  %v672 = vunpack.c.l.b16 %v605
  %v673 = vunpack.c.h.b16 %v605
  %v674 = vunpack.c.l.b16 %v606
  %v675 = vunpack.c.h.b16 %v606
  %v676 = vunpack.c.l.b16 %v607
  %v677 = vunpack.c.h.b16 %v607
  %v678 = vunpack.c.l.b16 %v608
  %v679 = vunpack.c.h.b16 %v608
  %v680 = vunpack.c.l.b16 %v609
  %v681 = vunpack.c.h.b16 %v609
  %v682 = vunpack.c.l.b16 %v610
  %v683 = vunpack.c.h.b16 %v610
  %v684 = vunpack.c.l.b16 %v611
  %v685 = vunpack.c.h.b16 %v611
  %v686 = vunpack.c.l.b16 %v612
  %v687 = vunpack.c.h.b16 %v612
  %v688 = vunpack.c.l.b16 %v613
  %v689 = vunpack.c.h.b16 %v613
  %v690 = vunpack.c.l.b16 %v614
  %v691 = vunpack.c.h.b16 %v614
  %v692 = vunpack.c.l.b16 %v615
  %v693 = vunpack.c.h.b16 %v615
  %v694 = vunpack.c.l.b16 %v616
  %v695 = vunpack.c.h.b16 %v616
  %v696 = vunpack.c.l.b16 %v617
  %v697 = vunpack.c.h.b16 %v617
  %v698 = vunpack.c.l.b16 %v618
  %v699 = vunpack.c.h.b16 %v618
  %v700 = vunpack.c.l.b16 %v619
  %v701 = vunpack.c.h.b16 %v619
  %v702 = vunpack.c.l.b16 %v620
  %v703 = vunpack.c.h.b16 %v620
  %v704 = vunpack.c.l.b16 %v621
  %v705 = vunpack.c.h.b16 %v621
  %v706 = vunpack.c.l.b16 %v622
  %v707 = vunpack.c.h.b16 %v622
  %v708 = vunpack.c.l.b16 %v623
  %v709 = vunpack.c.h.b16 %v623
  %v710 = vunpack.c.l.b16 %v624
  %v711 = vpack.c.b16 %v654, %v654
  %v712 = vpack.c.b16 %v655, %v655
  %v713 = vpack.c.b16 %v656, %v656
  %v714 = vpack.c.b16 %v657, %v657
  %v715 = vpack.c.b16 %v658, %v658
  %v716 = vpack.c.b16 %v659, %v659
  %v717 = vpack.c.b16 %v660, %v660
  %v718 = vpack.c.b16 %v661, %v661
  %v719 = vpack.c.b16 %v662, %v662
  %v720 = vpack.c.b16 %v663, %v663
  %v721 = vpack.c.b16 %v664, %v664
  %v722 = vpack.c.b16 %v665, %v665
  %v723 = vpack.c.b16 %v666, %v666
  %v724 = vpack.c.b16 %v667, %v667
  %v725 = vpack.c.b16 %v668, %v668
  %v726 = vpack.c.b16 %v669, %v669
  %v727 = vpack.c.b16 %v670, %v670
  %v728 = vpack.c.b16 %v671, %v671
  %v729 = vpack.c.b16 %v672, %v672
  %v730 = vpack.c.b16 %v673, %v673
  %v731 = vpack.c.b16 %v674, %v674
  %v732 = vpack.c.b16 %v675, %v675
  %v733 = vpack.c.b16 %v676, %v676
  %v734 = vpack.c.b16 %v677, %v677
  %v735 = vpack.c.b16 %v678, %v678
  %v736 = vpack.c.b16 %v679, %v679
  %v737 = vpack.c.b16 %v680, %v680
  %v738 = vpack.c.b16 %v681, %v681
  %v739 = vpack.c.b16 %v682, %v682
  %v740 = vpack.c.b16 %v683, %v683
  %v741 = vpack.c.b16 %v684, %v684
  %v742 = vpack.c.b16 %v685, %v685
  %v743 = vpack.c.b16 %v686, %v686
  %v744 = vpack.c.b16 %v687, %v687
  %v745 = vpack.c.b16 %v688, %v688
  %v746 = vpack.c.b16 %v689, %v689
  %v747 = vpack.c.b16 %v690, %v690
  %v748 = vpack.c.b16 %v691, %v691
  %v749 = vpack.c.b16 %v692, %v692
  %v750 = vpack.c.b16 %v693, %v693
  %v751 = vpack.c.b16 %v694, %v694
  %v752 = vpack.c.b16 %v695, %v695
  %v753 = vpack.c.b16 %v696, %v696
  %v754 = vpack.c.b16 %v697, %v697
  %v755 = vpack.c.b16 %v698, %v698
  %v756 = vpack.c.b16 %v699, %v699
  %v757 = vpack.c.b16 %v700, %v700
  %v758 = vpack.c.b16 %v701, %v701
  %v759 = vpack.c.b16 %v702, %v702
  %v760 = vpack.c.b16 %v703, %v703
  %v761 = vpack.c.b16 %v704, %v704
  %v762 = vpack.c.b16 %v705, %v705
  %v763 = vpack.c.b16 %v706, %v706
  %v764 = vpack.c.b16 %v707, %v707
  %v765 = vpack.c.b16 %v708, %v708
  %v766 = vpack.c.b16 %v709, %v709
  %v767 = vpack.c.b16 %v710, %v710
  %vm825 = vcmask 257024
  %826 = vst.msk [vmem:[%s3] sm:$0xf] %vm825, %v711
  %827 = vst.msk [vmem:[%s3 + $0x4] sm:$0xf] %vm825, %v712
  %828 = vst.msk [vmem:[%s3 + $0x8] sm:$0xf] %vm825, %v713
  %829 = vst.msk [vmem:[%s3 + $0xc] sm:$0xf] %vm825, %v714
  %830 = vst.msk [vmem:[%s3 + $0x10] sm:$0xf] %vm825, %v715
  %831 = vst.msk [vmem:[%s3 + $0x14] sm:$0xf] %vm825, %v716
  %832 = vst.msk [vmem:[%s3 + $0x18] sm:$0xf] %vm825, %v717
  %833 = vst.msk [vmem:[%s3 + $0x1c] sm:$0xf] %vm825, %v718
  %834 = vst.msk [vmem:[%s3 + $0x20] sm:$0xf] %vm825, %v719
  %835 = vst.msk [vmem:[%s3 + $0x24] sm:$0xf] %vm825, %v720
  %836 = vst.msk [vmem:[%s3 + $0x28] sm:$0xf] %vm825, %v721
  %837 = vst.msk [vmem:[%s3 + $0x2c] sm:$0xf] %vm825, %v722
  %838 = vst.msk [vmem:[%s3 + $0x30] sm:$0xf] %vm825, %v723
  %839 = vst.msk [vmem:[%s3 + $0x34] sm:$0xf] %vm825, %v724
  %840 = vst.msk [vmem:[%s3 + $0x38] sm:$0xf] %vm825, %v725
  %841 = vst.msk [vmem:[%s3 + $0x3c] sm:$0xf] %vm825, %v726
  %842 = vst.msk [vmem:[%s3 + $0x40] sm:$0xf] %vm825, %v727
  %843 = vst.msk [vmem:[%s3 + $0x44] sm:$0xf] %vm825, %v728
  %844 = vst.msk [vmem:[%s3 + $0x48] sm:$0xf] %vm825, %v729
  %845 = vst.msk [vmem:[%s3 + $0x4c] sm:$0xf] %vm825, %v730
  %846 = vst.msk [vmem:[%s3 + $0x50] sm:$0xf] %vm825, %v731
  %847 = vst.msk [vmem:[%s3 + $0x54] sm:$0xf] %vm825, %v732
  %848 = vst.msk [vmem:[%s3 + $0x58] sm:$0xf] %vm825, %v733
  %849 = vst.msk [vmem:[%s3 + $0x5c] sm:$0xf] %vm825, %v734
  %850 = vst.msk [vmem:[%s3 + $0x60] sm:$0xf] %vm825, %v735
  %851 = vst.msk [vmem:[%s3 + $0x64] sm:$0xf] %vm825, %v736
  %852 = vst.msk [vmem:[%s3 + $0x68] sm:$0xf] %vm825, %v737
  %853 = vst.msk [vmem:[%s3 + $0x6c] sm:$0xf] %vm825, %v738
  %854 = vst.msk [vmem:[%s3 + $0x70] sm:$0xf] %vm825, %v739
  %855 = vst.msk [vmem:[%s3 + $0x74] sm:$0xf] %vm825, %v740
  %856 = vst.msk [vmem:[%s3 + $0x78] sm:$0xf] %vm825, %v741
  %857 = vst.msk [vmem:[%s3 + $0x7c] sm:$0xf] %vm825, %v742
  %858 = vst.msk [vmem:[%s3 + $0x80] sm:$0xf] %vm825, %v743
  %859 = vst.msk [vmem:[%s3 + $0x84] sm:$0xf] %vm825, %v744
  %860 = vst.msk [vmem:[%s3 + $0x88] sm:$0xf] %vm825, %v745
  %861 = vst.msk [vmem:[%s3 + $0x8c] sm:$0xf] %vm825, %v746
  %862 = vst.msk [vmem:[%s3 + $0x90] sm:$0xf] %vm825, %v747
  %863 = vst.msk [vmem:[%s3 + $0x94] sm:$0xf] %vm825, %v748
  %864 = vst.msk [vmem:[%s3 + $0x98] sm:$0xf] %vm825, %v749
  %865 = vst.msk [vmem:[%s3 + $0x9c] sm:$0xf] %vm825, %v750
  %866 = vst.msk [vmem:[%s3 + $0xa0] sm:$0xf] %vm825, %v751
  %867 = vst.msk [vmem:[%s3 + $0xa4] sm:$0xf] %vm825, %v752
  %868 = vst.msk [vmem:[%s3 + $0xa8] sm:$0xf] %vm825, %v753
  %869 = vst.msk [vmem:[%s3 + $0xac] sm:$0xf] %vm825, %v754
  %870 = vst.msk [vmem:[%s3 + $0xb0] sm:$0xf] %vm825, %v755
  %871 = vst.msk [vmem:[%s3 + $0xb4] sm:$0xf] %vm825, %v756
  %872 = vst.msk [vmem:[%s3 + $0xb8] sm:$0xf] %vm825, %v757
  %873 = vst.msk [vmem:[%s3 + $0xbc] sm:$0xf] %vm825, %v758
  %874 = vst.msk [vmem:[%s3 + $0xc0] sm:$0xf] %vm825, %v759
  %875 = vst.msk [vmem:[%s3 + $0xc4] sm:$0xf] %vm825, %v760
  %876 = vst.msk [vmem:[%s3 + $0xc8] sm:$0xf] %vm825, %v761
  %877 = vst.msk [vmem:[%s3 + $0xcc] sm:$0xf] %vm825, %v762
  %878 = vst.msk [vmem:[%s3 + $0xd0] sm:$0xf] %vm825, %v763
  %879 = vst.msk [vmem:[%s3 + $0xd4] sm:$0xf] %vm825, %v764
  %880 = vst.msk [vmem:[%s3 + $0xd8] sm:$0xf] %vm825, %v765
  %881 = vst.msk [vmem:[%s3 + $0xdc] sm:$0xf] %vm825, %v766
  %vm882 = vcmask 253952
  %883 = vst.msk [vmem:[%s3 + $0xe0] sm:$0x1] %vm882, %v767
  // Predicated region
  $region14: #{tpu_custom_call.1} parent=0 // pred_check
    _
  $region15: #{tpu_custom_call.1} parent=0 // pred_check_branch
    %885 = sbr.rel (0) target = $region17
  $region16: #{tpu_custom_call.1} parent=0 // pred_region
    _
  $region17: #{tpu_custom_call.1} parent=0 // pred_fallthru
    _
  // Predicated region
  $region18: #{tpu_custom_call.1} parent=0 // pred_check
    _
  $region19: #{tpu_custom_call.1} parent=0 // pred_check_branch
    %887 = sbr.rel (0) target = $region21
  $region20: #{tpu_custom_call.1} parent=0 // pred_region
    _
  $region21: #{tpu_custom_call.1} parent=0 // pred_fallthru
    _

</llo_original>
